<compile_context>
chip_gen: v5e
topology: v5e:2x2
jax: 0.10.0
libtpu: 0.0.40
codegen_flags: <defaults>
</compile_context>

<pallas_src>
import jax
import jax.numpy as jnp
from jax import lax
from jax.experimental import pallas as pl
from jax.experimental.pallas import tpu as pltpu

EPS = 1e-5          # nn.BatchNorm1d default eps (training-mode batch statistics)
LANE = 128          # lane-dense padded feature width
_VMEM = pl.BlockSpec(memory_space=pltpu.MemorySpace.VMEM)

# Row layout of the stacked small-vector operand (f32, (16, 128)):
#   per layer: [b0, b1, gamma, beta]; then fc1 bias; then fused head biases.
_VECROW_L0, _VECROW_L1, _VECROW_BFC, _VECROW_BH, _VEC_ROWS = 0, 4, 8, 9, 16
# Row offsets into the stacked bf16 weight operand ((768, 128)):
#   per layer: [w0 (128 rows); w1 (128 rows)]; then fc1; then fused heads.
_WROW_L0, _WROW_L1, _WROW_FC, _WROW_H = 0, 256, 512, 640


def _fused_forward_kernel(x_ref, a_ref, p_ref, w_ref, vec_ref, o_ref):
    """Full GraphConvClf forward: 2x(GraphConv+BN+ReLU) -> mean pool -> fc1+ReLU -> heads."""
    a = a_ref[...]                                # (V, V) bf16, values 0/1/2 (exact in bf16)
    inv_v = 1.0 / x_ref.shape[0]
    # vertex degrees (A @ 1), small exact integers; derived in-kernel (one fewer DMA)
    deg = jnp.sum(a.astype(jnp.float32), axis=1, keepdims=True)           # (V, 1) f32

    def gconv_bn_relu(hb, w_row, vec_row):
        # neighbor sums first: (A @ h) carries the (small, padded) input width
        ah = jnp.dot(a, hb, preferred_element_type=jnp.float32)           # (V, 128) f32
        # x@w0 + (A@x)@w1 as two accumulated K=128 dots; degree-scaled b1 restores
        # the original A @ (x@w1 + b1) ordering exactly.
        z = (jnp.dot(hb, w_ref[w_row:w_row + LANE, :],
                     preferred_element_type=jnp.float32)
             + jnp.dot(ah.astype(jnp.bfloat16),
                       w_ref[w_row + LANE:w_row + 2 * LANE, :],
                       preferred_element_type=jnp.float32)
             + vec_ref[vec_row:vec_row + 1, :]                            # b0
             + deg * vec_ref[vec_row + 1:vec_row + 2, :])                 # deg * b1
        # BatchNorm1d (batch stats, biased var), one-pass sum / sum-of-squares, folded affine
        mu = jnp.sum(z, axis=0, keepdims=True) * inv_v
        var = jnp.sum(z * z, axis=0, keepdims=True) * inv_v - mu * mu
        scale = vec_ref[vec_row + 2:vec_row + 3, :] * lax.rsqrt(var + EPS)   # gamma * rsqrt
        shift = vec_ref[vec_row + 3:vec_row + 4, :] - scale * mu             # beta - scale*mu
        return jnp.maximum(scale * z + shift, 0.0).astype(jnp.bfloat16)      # ReLU, bf16 act

    h = gconv_bn_relu(x_ref[...], _WROW_L0, _VECROW_L0)
    h = gconv_bn_relu(h, _WROW_L1, _VECROW_L1)

    # per-mesh mean pool (P is the (M, V) row-normalized membership matrix)
    pooled = jnp.dot(p_ref[...], h, preferred_element_type=jnp.float32)   # (M, 128) f32
    fc = jnp.maximum(
        jnp.dot(pooled.astype(jnp.bfloat16), w_ref[_WROW_FC:_WROW_FC + LANE, :],
                preferred_element_type=jnp.float32)
        + vec_ref[_VECROW_BFC:_VECROW_BFC + 1, :], 0.0)
    # all 4 classification heads fused into one lane-dense (128-wide) matmul
    o_ref[...] = (jnp.dot(fc.astype(jnp.bfloat16), w_ref[_WROW_H:_WROW_H + LANE, :],
                          preferred_element_type=jnp.float32)
                  + vec_ref[_VECROW_BH:_VECROW_BH + 1, :])


def graph_conv_clf_forward(x_bf16, a_bf16, p_bf16, wstack, vecs):
    v = x_bf16.shape[0]
    m = p_bf16.shape[0]
    operands = (x_bf16, a_bf16, p_bf16, wstack, vecs)

    flops = (2 * (2 * v * v * LANE            # two A @ h neighbor matmuls
                  + 2 * 2 * v * LANE * LANE)  # two (h@w0 + (A@h)@w1) dot pairs
             + 2 * m * v * LANE               # mean pooling
             + 2 * 2 * m * LANE * LANE)       # fc1 + fused heads
    bytes_accessed = sum(int(t.size) * t.dtype.itemsize for t in operands) + m * LANE * 4

    return pl.pallas_call(
        _fused_forward_kernel,
        out_shape=jax.ShapeDtypeStruct((m, LANE), jnp.float32),
        in_specs=[_VMEM] * len(operands),
        out_specs=_VMEM,
        compiler_params=pltpu.CompilerParams(vmem_limit_bytes=32 * 1024 * 1024),
        cost_estimate=pl.CostEstimate(flops=flops, transcendentals=2 * LANE,
                                      bytes_accessed=bytes_accessed),
    )(*operands)


def _pad_to(arr, rows, cols):
    out = jnp.zeros((rows, cols), arr.dtype)
    return out.at[:arr.shape[0], :arr.shape[1]].set(arr)


if __name__ == "__main__":
    # cfg: INPUT_MESH_FEATS=3, HIDDEN_DIMS=[32, 64], nn1=128, heads (3, 2, 4, 5).
    input_dim = 3
    hidden_dims = [32, 64]
    dims = [input_dim] + hidden_dims
    n_meshes = 2
    verts_per_mesh = 16
    V = n_meshes * verts_per_mesh

    keys = iter(jax.random.split(jax.random.PRNGKey(0), 40))

    def rnd(shape, scale=0.01):
        return scale * jax.random.normal(next(keys), shape, jnp.float32)

    # GraphConv + BatchNorm parameters. Weights stored bf16 ((in, out) layout for h @ W);
    # biases/gamma/beta f32. Non-zero biases/affine so the reordered deg*b1 path is exercised.
    layers = []
    for i in range(len(dims) - 1):
        din, dout = dims[i], dims[i + 1]
        layers.append(dict(
            w0=rnd((din, dout)).astype(jnp.bfloat16), b0=rnd((dout,)),
            w1=rnd((din, dout)).astype(jnp.bfloat16), b1=rnd((dout,)),
            gamma=1.0 + rnd((dout,), 0.1), beta=rnd((dout,), 0.1)))

    nn1 = 128
    wfc1 = rnd((dims[-1], nn1)).astype(jnp.bfloat16)
    bfc1 = rnd((nn1,))
    head_sizes = (3, 2, 4, 5)            # style, semantics, functionality, aesthetics
    head_ws = [rnd((nn1, s)).astype(jnp.bfloat16) for s in head_sizes]
    head_bs = [rnd((s,)) for s in head_sizes]

    # Synthetic "mesh": packed verts, per-mesh ring edges, packed-to-mesh index.
    verts = jax.random.normal(next(keys), (V, input_dim), jnp.float32)
    edge_list = []
    for mm in range(n_meshes):
        off = mm * verts_per_mesh
        for vv in range(verts_per_mesh):
            edge_list.append((off + vv, off + (vv + 1) % verts_per_mesh))
    edges = jnp.array(edge_list, jnp.int32)                              # (E, 2)
    verts_idx = jnp.repeat(jnp.arange(n_meshes, dtype=jnp.int32), verts_per_mesh)

    # Host glue: dense undirected adjacency, per-mesh mean-pool matrix.
    A = jnp.zeros((V, V), jnp.float32)
    A = A.at[edges[:, 0], edges[:, 1]].add(1.0)
    A = A.at[edges[:, 1], edges[:, 0]].add(1.0)
    one_hot = (verts_idx[None, :] == jnp.arange(n_meshes)[:, None]).astype(jnp.float32)
    P = one_hot / one_hot.sum(axis=1, keepdims=True)                     # (M, V) mean pool

    # Pack all bf16 weights into one stacked (768, 128) operand (lane-dense, zero-padded).
    wstack = jnp.concatenate([
        _pad_to(layers[0]["w0"], LANE, LANE), _pad_to(layers[0]["w1"], LANE, LANE),
        _pad_to(layers[1]["w0"], LANE, LANE), _pad_to(layers[1]["w1"], LANE, LANE),
        _pad_to(wfc1, LANE, LANE),
        _pad_to(jnp.concatenate(head_ws, axis=1), LANE, LANE),
    ], axis=0)                                                           # (768, 128) bf16

    # Pack all small f32 vectors into one (16, 128) operand (zero pad keeps pad cols at 0).
    vec_rows = [layers[0]["b0"], layers[0]["b1"], layers[0]["gamma"], layers[0]["beta"],
                layers[1]["b0"], layers[1]["b1"], layers[1]["gamma"], layers[1]["beta"],
                bfc1, jnp.concatenate(head_bs, axis=0)]
    vecs = jnp.zeros((_VEC_ROWS, LANE), jnp.float32)
    for r, vrow in enumerate(vec_rows):
        vecs = vecs.at[r, :vrow.shape[0]].set(vrow)

    x_pad = _pad_to(verts, V, LANE).astype(jnp.bfloat16)                 # (V, 128) bf16
    A_bf = A.astype(jnp.bfloat16)                                        # 0/1/2: exact in bf16
    P_bf = P.astype(jnp.bfloat16)                                        # 1/16: exact in bf16

    # Single fused Pallas kernel for the whole forward pass.
    out_all = graph_conv_clf_forward(x_pad, A_bf, P_bf, wstack, vecs)
    out_all = jax.block_until_ready(out_all)
    offsets = [0, 3, 5, 9]
    outs = [out_all[:, o:o + s] for o, s in zip(offsets, head_sizes)]

    # Pure-JAX reference, original op order (f32 math on the bf16-stored parameters).
    hr = verts
    for lp in layers:
        w0 = lp["w0"].astype(jnp.float32)
        w1 = lp["w1"].astype(jnp.float32)
        z = hr @ w0 + lp["b0"] + A @ (hr @ w1 + lp["b1"])
        mu = z.mean(0, keepdims=True)
        var = jnp.square(z - mu).mean(0, keepdims=True)
        hr = jnp.maximum(lp["gamma"] * (z - mu) / jnp.sqrt(var + EPS) + lp["beta"], 0.0)
    pooled = P @ hr
    fc = jnp.maximum(pooled @ wfc1.astype(jnp.float32) + bfc1, 0.0)
    refs = [fc @ w.astype(jnp.float32) + b for w, b in zip(head_ws, head_bs)]

    for got, want in zip(outs, refs):
        assert got.shape == want.shape
        assert jnp.allclose(got, want, rtol=2e-2, atol=1e-3), \
            float(jnp.max(jnp.abs(got - want)))

    print("KERNEL_OK")
</pallas_src>

<mosaic_0001>
module attributes {stable_mosaic.version = 11 : i64} {
  func.func @_fused_forward_kernel(%arg0: memref<32x128xbf16, #tpu.memory_space<vmem>>, %arg1: memref<32x32xbf16, #tpu.memory_space<vmem>>, %arg2: memref<2x32xbf16, #tpu.memory_space<vmem>>, %arg3: memref<768x128xbf16, #tpu.memory_space<vmem>>, %arg4: memref<16x128xf32, #tpu.memory_space<vmem>>, %arg5: memref<2x128xf32, #tpu.memory_space<vmem>>) attributes {dimension_semantics = [], scalar_prefetch = 0 : i64, scratch_operands = 0 : i64, tpu.core_type = #tpu.core_type<tc>} {
    %c0 = arith.constant 0 : index
    %c0_0 = arith.constant 0 : index
    %0 = vector.load %arg1[%c0, %c0_0] : memref<32x32xbf16, #tpu.memory_space<vmem>>, vector<32x32xbf16>
    %1 = arith.extf %0 : vector<32x32xbf16> to vector<32x32xf32>
    %cst = arith.constant dense<0.000000e+00> : vector<32xf32>
    %2 = vector.multi_reduction <add>, %1, %cst [1] : vector<32x32xf32> to vector<32xf32>
    %3 = vector.shape_cast %2 : vector<32xf32> to vector<32x1xf32>
    %c0_1 = arith.constant 0 : index
    %c0_2 = arith.constant 0 : index
    %4 = vector.load %arg0[%c0_1, %c0_2] : memref<32x128xbf16, #tpu.memory_space<vmem>>, vector<32x128xbf16>
    %cst_3 = arith.constant dense<0.000000e+00> : vector<32x128xf32>
    %5 = tpu.matmul %0, %4, %cst_3 {dimension_numbers = #tpu.dot_dimension_numbers<[1], [0], [0], [1], [0, 0, 1, 1], [], []>} : vector<32x32xbf16>, vector<32x128xbf16>, vector<32x128xf32> -> vector<32x128xf32>
    %c0_4 = arith.constant 0 : index
    %c0_5 = arith.constant 0 : index
    %6 = vector.load %arg3[%c0_4, %c0_5] : memref<768x128xbf16, #tpu.memory_space<vmem>>, vector<128x128xbf16>
    %cst_6 = arith.constant dense<0.000000e+00> : vector<32x128xf32>
    %7 = tpu.matmul %4, %6, %cst_6 {dimension_numbers = #tpu.dot_dimension_numbers<[1], [0], [0], [1], [0, 0, 1, 1], [], []>} : vector<32x128xbf16>, vector<128x128xbf16>, vector<32x128xf32> -> vector<32x128xf32>
    %8 = arith.truncf %5 : vector<32x128xf32> to vector<32x128xbf16>
    %c128 = arith.constant 128 : index
    %c0_7 = arith.constant 0 : index
    %9 = vector.load %arg3[%c128, %c0_7] : memref<768x128xbf16, #tpu.memory_space<vmem>>, vector<128x128xbf16>
    %cst_8 = arith.constant dense<0.000000e+00> : vector<32x128xf32>
    %10 = tpu.matmul %8, %9, %cst_8 {dimension_numbers = #tpu.dot_dimension_numbers<[1], [0], [0], [1], [0, 0, 1, 1], [], []>} : vector<32x128xbf16>, vector<128x128xbf16>, vector<32x128xf32> -> vector<32x128xf32>
    %11 = arith.addf %7, %10 : vector<32x128xf32>
    %c0_9 = arith.constant 0 : index
    %c0_10 = arith.constant 0 : index
    %12 = vector.load %arg4[%c0_9, %c0_10] : memref<16x128xf32, #tpu.memory_space<vmem>>, vector<1x128xf32>
    %13 = vector.broadcast %12 : vector<1x128xf32> to vector<32x128xf32>
    %14 = arith.addf %11, %13 : vector<32x128xf32>
    %c1 = arith.constant 1 : index
    %c0_11 = arith.constant 0 : index
    %15 = vector.load %arg4[%c1, %c0_11] : memref<16x128xf32, #tpu.memory_space<vmem>>, vector<1x128xf32>
    %16 = vector.broadcast %3 : vector<32x1xf32> to vector<32x128xf32>
    %17 = vector.broadcast %15 : vector<1x128xf32> to vector<32x128xf32>
    %18 = arith.mulf %16, %17 : vector<32x128xf32>
    %19 = arith.addf %14, %18 : vector<32x128xf32>
    %cst_12 = arith.constant dense<0.000000e+00> : vector<128xf32>
    %20 = vector.multi_reduction <add>, %19, %cst_12 [0] : vector<32x128xf32> to vector<128xf32>
    %21 = vector.shape_cast %20 : vector<128xf32> to vector<1x128xf32>
    %cst_13 = arith.constant 3.125000e-02 : f32
    %22 = vector.broadcast %cst_13 : f32 to vector<1x128xf32>
    %23 = arith.mulf %21, %22 : vector<1x128xf32>
    %24 = arith.mulf %19, %19 : vector<32x128xf32>
    %cst_14 = arith.constant dense<0.000000e+00> : vector<128xf32>
    %25 = vector.multi_reduction <add>, %24, %cst_14 [0] : vector<32x128xf32> to vector<128xf32>
    %26 = vector.shape_cast %25 : vector<128xf32> to vector<1x128xf32>
    %cst_15 = arith.constant 3.125000e-02 : f32
    %27 = vector.broadcast %cst_15 : f32 to vector<1x128xf32>
    %28 = arith.mulf %26, %27 : vector<1x128xf32>
    %29 = arith.mulf %23, %23 : vector<1x128xf32>
    %30 = arith.subf %28, %29 : vector<1x128xf32>
    %c2 = arith.constant 2 : index
    %c0_16 = arith.constant 0 : index
    %31 = vector.load %arg4[%c2, %c0_16] : memref<16x128xf32, #tpu.memory_space<vmem>>, vector<1x128xf32>
    %cst_17 = arith.constant 9.99999974E-6 : f32
    %32 = vector.broadcast %cst_17 : f32 to vector<1x128xf32>
    %33 = arith.addf %30, %32 : vector<1x128xf32>
    %34 = math.rsqrt %33 : vector<1x128xf32>
    %35 = arith.mulf %31, %34 : vector<1x128xf32>
    %c3 = arith.constant 3 : index
    %c0_18 = arith.constant 0 : index
    %36 = vector.load %arg4[%c3, %c0_18] : memref<16x128xf32, #tpu.memory_space<vmem>>, vector<1x128xf32>
    %37 = arith.mulf %35, %23 : vector<1x128xf32>
    %38 = arith.subf %36, %37 : vector<1x128xf32>
    %39 = vector.broadcast %35 : vector<1x128xf32> to vector<32x128xf32>
    %40 = arith.mulf %39, %19 : vector<32x128xf32>
    %41 = vector.broadcast %38 : vector<1x128xf32> to vector<32x128xf32>
    %42 = arith.addf %40, %41 : vector<32x128xf32>
    %cst_19 = arith.constant 0.000000e+00 : f32
    %43 = vector.broadcast %cst_19 : f32 to vector<32x128xf32>
    %44 = arith.maximumf %42, %43 : vector<32x128xf32>
    %45 = arith.truncf %44 : vector<32x128xf32> to vector<32x128xbf16>
    %cst_20 = arith.constant dense<0.000000e+00> : vector<32x128xf32>
    %46 = tpu.matmul %0, %45, %cst_20 {dimension_numbers = #tpu.dot_dimension_numbers<[1], [0], [0], [1], [0, 0, 1, 1], [], []>} : vector<32x32xbf16>, vector<32x128xbf16>, vector<32x128xf32> -> vector<32x128xf32>
    %c256 = arith.constant 256 : index
    %c0_21 = arith.constant 0 : index
    %47 = vector.load %arg3[%c256, %c0_21] : memref<768x128xbf16, #tpu.memory_space<vmem>>, vector<128x128xbf16>
    %cst_22 = arith.constant dense<0.000000e+00> : vector<32x128xf32>
    %48 = tpu.matmul %45, %47, %cst_22 {dimension_numbers = #tpu.dot_dimension_numbers<[1], [0], [0], [1], [0, 0, 1, 1], [], []>} : vector<32x128xbf16>, vector<128x128xbf16>, vector<32x128xf32> -> vector<32x128xf32>
    %49 = arith.truncf %46 : vector<32x128xf32> to vector<32x128xbf16>
    %c384 = arith.constant 384 : index
    %c0_23 = arith.constant 0 : index
    %50 = vector.load %arg3[%c384, %c0_23] : memref<768x128xbf16, #tpu.memory_space<vmem>>, vector<128x128xbf16>
    %cst_24 = arith.constant dense<0.000000e+00> : vector<32x128xf32>
    %51 = tpu.matmul %49, %50, %cst_24 {dimension_numbers = #tpu.dot_dimension_numbers<[1], [0], [0], [1], [0, 0, 1, 1], [], []>} : vector<32x128xbf16>, vector<128x128xbf16>, vector<32x128xf32> -> vector<32x128xf32>
    %52 = arith.addf %48, %51 : vector<32x128xf32>
    %c4 = arith.constant 4 : index
    %c0_25 = arith.constant 0 : index
    %53 = vector.load %arg4[%c4, %c0_25] : memref<16x128xf32, #tpu.memory_space<vmem>>, vector<1x128xf32>
    %54 = vector.broadcast %53 : vector<1x128xf32> to vector<32x128xf32>
    %55 = arith.addf %52, %54 : vector<32x128xf32>
    %c5 = arith.constant 5 : index
    %c0_26 = arith.constant 0 : index
    %56 = vector.load %arg4[%c5, %c0_26] : memref<16x128xf32, #tpu.memory_space<vmem>>, vector<1x128xf32>
    %57 = vector.broadcast %3 : vector<32x1xf32> to vector<32x128xf32>
    %58 = vector.broadcast %56 : vector<1x128xf32> to vector<32x128xf32>
    %59 = arith.mulf %57, %58 : vector<32x128xf32>
    %60 = arith.addf %55, %59 : vector<32x128xf32>
    %cst_27 = arith.constant dense<0.000000e+00> : vector<128xf32>
    %61 = vector.multi_reduction <add>, %60, %cst_27 [0] : vector<32x128xf32> to vector<128xf32>
    %62 = vector.shape_cast %61 : vector<128xf32> to vector<1x128xf32>
    %cst_28 = arith.constant 3.125000e-02 : f32
    %63 = vector.broadcast %cst_28 : f32 to vector<1x128xf32>
    %64 = arith.mulf %62, %63 : vector<1x128xf32>
    %65 = arith.mulf %60, %60 : vector<32x128xf32>
    %cst_29 = arith.constant dense<0.000000e+00> : vector<128xf32>
    %66 = vector.multi_reduction <add>, %65, %cst_29 [0] : vector<32x128xf32> to vector<128xf32>
    %67 = vector.shape_cast %66 : vector<128xf32> to vector<1x128xf32>
    %cst_30 = arith.constant 3.125000e-02 : f32
    %68 = vector.broadcast %cst_30 : f32 to vector<1x128xf32>
    %69 = arith.mulf %67, %68 : vector<1x128xf32>
    %70 = arith.mulf %64, %64 : vector<1x128xf32>
    %71 = arith.subf %69, %70 : vector<1x128xf32>
    %c6 = arith.constant 6 : index
    %c0_31 = arith.constant 0 : index
    %72 = vector.load %arg4[%c6, %c0_31] : memref<16x128xf32, #tpu.memory_space<vmem>>, vector<1x128xf32>
    %cst_32 = arith.constant 9.99999974E-6 : f32
    %73 = vector.broadcast %cst_32 : f32 to vector<1x128xf32>
    %74 = arith.addf %71, %73 : vector<1x128xf32>
    %75 = math.rsqrt %74 : vector<1x128xf32>
    %76 = arith.mulf %72, %75 : vector<1x128xf32>
    %c7 = arith.constant 7 : index
    %c0_33 = arith.constant 0 : index
    %77 = vector.load %arg4[%c7, %c0_33] : memref<16x128xf32, #tpu.memory_space<vmem>>, vector<1x128xf32>
    %78 = arith.mulf %76, %64 : vector<1x128xf32>
    %79 = arith.subf %77, %78 : vector<1x128xf32>
    %80 = vector.broadcast %76 : vector<1x128xf32> to vector<32x128xf32>
    %81 = arith.mulf %80, %60 : vector<32x128xf32>
    %82 = vector.broadcast %79 : vector<1x128xf32> to vector<32x128xf32>
    %83 = arith.addf %81, %82 : vector<32x128xf32>
    %cst_34 = arith.constant 0.000000e+00 : f32
    %84 = vector.broadcast %cst_34 : f32 to vector<32x128xf32>
    %85 = arith.maximumf %83, %84 : vector<32x128xf32>
    %86 = arith.truncf %85 : vector<32x128xf32> to vector<32x128xbf16>
    %c0_35 = arith.constant 0 : index
    %c0_36 = arith.constant 0 : index
    %87 = vector.load %arg2[%c0_35, %c0_36] : memref<2x32xbf16, #tpu.memory_space<vmem>>, vector<2x32xbf16>
    %cst_37 = arith.constant dense<0.000000e+00> : vector<2x128xf32>
    %88 = tpu.matmul %87, %86, %cst_37 {dimension_numbers = #tpu.dot_dimension_numbers<[1], [0], [0], [1], [0, 0, 1, 1], [], []>} : vector<2x32xbf16>, vector<32x128xbf16>, vector<2x128xf32> -> vector<2x128xf32>
    %89 = arith.truncf %88 : vector<2x128xf32> to vector<2x128xbf16>
    %c512 = arith.constant 512 : index
    %c0_38 = arith.constant 0 : index
    %90 = vector.load %arg3[%c512, %c0_38] : memref<768x128xbf16, #tpu.memory_space<vmem>>, vector<128x128xbf16>
    %cst_39 = arith.constant dense<0.000000e+00> : vector<2x128xf32>
    %91 = tpu.matmul %89, %90, %cst_39 {dimension_numbers = #tpu.dot_dimension_numbers<[1], [0], [0], [1], [0, 0, 1, 1], [], []>} : vector<2x128xbf16>, vector<128x128xbf16>, vector<2x128xf32> -> vector<2x128xf32>
    %c8 = arith.constant 8 : index
    %c0_40 = arith.constant 0 : index
    %92 = vector.load %arg4[%c8, %c0_40] : memref<16x128xf32, #tpu.memory_space<vmem>>, vector<1x128xf32>
    %93 = vector.broadcast %92 : vector<1x128xf32> to vector<2x128xf32>
    %94 = arith.addf %91, %93 : vector<2x128xf32>
    %cst_41 = arith.constant 0.000000e+00 : f32
    %95 = vector.broadcast %cst_41 : f32 to vector<2x128xf32>
    %96 = arith.maximumf %94, %95 : vector<2x128xf32>
    %97 = arith.truncf %96 : vector<2x128xf32> to vector<2x128xbf16>
    %c640 = arith.constant 640 : index
    %c0_42 = arith.constant 0 : index
    %98 = vector.load %arg3[%c640, %c0_42] : memref<768x128xbf16, #tpu.memory_space<vmem>>, vector<128x128xbf16>
    %cst_43 = arith.constant dense<0.000000e+00> : vector<2x128xf32>
    %99 = tpu.matmul %97, %98, %cst_43 {dimension_numbers = #tpu.dot_dimension_numbers<[1], [0], [0], [1], [0, 0, 1, 1], [], []>} : vector<2x128xbf16>, vector<128x128xbf16>, vector<2x128xf32> -> vector<2x128xf32>
    %c9 = arith.constant 9 : index
    %c0_44 = arith.constant 0 : index
    %100 = vector.load %arg4[%c9, %c0_44] : memref<16x128xf32, #tpu.memory_space<vmem>>, vector<1x128xf32>
    %101 = vector.broadcast %100 : vector<1x128xf32> to vector<2x128xf32>
    %102 = arith.addf %99, %101 : vector<2x128xf32>
    %c0_45 = arith.constant 0 : index
    %c0_46 = arith.constant 0 : index
    %103 = vector.load %arg5[%c0_45, %c0_46] : memref<2x128xf32, #tpu.memory_space<vmem>>, vector<2x128xf32>
    tpu.vector_store %arg5[%c0_45, %c0_46], %102 {strides = array<i32>} : memref<2x128xf32, #tpu.memory_space<vmem>>, vector<2x128xf32>,
    return
  }
}

</mosaic_0001>

<llo_original>
// kernel: tpu_custom_call.1
$region0: #{tpu_custom_call.1}
  #allocation0 [shape = 'u32[]', space=smem, size = 0x4, offset = 0x4, fixed_abs, tag = 'smem constant byte address 0x4 - core index']
  #allocation1 [shape = 'u32[72,128]{1,0:T(1,128)}', space=vmem, size = 0x9000, scoped, tag = 'internal scratch']
  %s0 = inlined_call_operand.hbm [shape: bf16[32,128], index: 0, kind: input, shape index: {}]
  %s1 = inlined_call_operand.hbm [shape: bf16[32,32], index: 1, kind: input, shape index: {}]
  %s2 = inlined_call_operand.vmem [shape: bf16[2,32], index: 2, kind: input, shape index: {}]
  %s3 = inlined_call_operand.hbm [shape: bf16[768,128], index: 3, kind: input, shape index: {}]
  %s4 = inlined_call_operand.hbm [shape: f32[16,128], index: 4, kind: input, shape index: {}]
  %s5 = inlined_call_operand.hbm [shape: f32[2,128], index: 5, kind: output, shape index: {}]
  %s6 = sld [smem:[#allocation0]]
  $region46: #{tpu_custom_call.1} parent=0
    _
  %s8 = ssub.s32 1, %s6
  %s9 = scalar_select 0, %s8, %s6
  $region1: #{tpu_custom_call.1} parent=0
    #allocation2 [shape = 'u8[8192]{0}', space=vmem, size = 0x2000, scoped, tag = 'input window, operand 0, single buffered']
    #allocation3 [shape = 's32[1]{0}', space=sflag, size = 0x4, scoped, tag = 'scoped memory for tpu_custom_call.1']
    #allocation4 [shape = 's32[1]{0}', space=sflag, size = 0x4, scoped, tag = 'scoped memory for tpu_custom_call.1']
    #allocation5 [shape = 'u8[8192]{0}', space=vmem, size = 0x2000, scoped, tag = 'input window, operand 1, single buffered']
    #allocation6 [shape = 's32[1]{0}', space=sflag, size = 0x4, scoped, tag = 'scoped memory for tpu_custom_call.1']
    #allocation7 [shape = 'u8[196608]{0}', space=vmem, size = 0x30000, scoped, tag = 'input window, operand 3, single buffered']
    #allocation8 [shape = 'u8[8192]{0}', space=vmem, size = 0x2000, scoped, tag = 'input window, operand 4, single buffered']
    #allocation9 [shape = 's32[1]{0}', space=sflag, size = 0x4, scoped, tag = 'scoped memory for tpu_custom_call.1']
    #allocation10 [shape = 'u8[1024]{0}', space=vmem, size = 0x400, scoped, tag = 'output window, operand 0, single buffered']
    %10 = vsyncpa [#allocation3], 0
    %11 = vsyncpa [#allocation6], 0
    %12 = vsyncpa [#allocation9], 0
    %13 = vsyncpa [#allocation4], 0
    // Predicated region
    $region2: #{tpu_custom_call.1} parent=1 // pred_check
      _
    $region3: #{tpu_custom_call.1} parent=1 // pred_check_branch
      %15 = sbr.rel (0) target = $region5
    $region4: #{tpu_custom_call.1} parent=1 // pred_region
      %17 = vsyncadd [#allocation3], 0
      %s18 = sshll.u32 %s0, 4
      %s19 = int_to_ptr.hbm [resolvable:$true] %s18
      %s20 = sshll.u32 [#allocation2], 4
      %s21 = int_to_ptr.vmem [resolvable:$true] %s20
      %26 = dma.hbm_to_vmem [thread:$0]  %s19, 256, %s21, [#allocation3], 64, 64, 4
    $region5: #{tpu_custom_call.1} parent=1 // pred_fallthru
      _
    // Predicated region
    $region6: #{tpu_custom_call.1} parent=1 // pred_check
      _
    $region7: #{tpu_custom_call.1} parent=1 // pred_check_branch
      %28 = sbr.rel (0) target = $region9
    $region8: #{tpu_custom_call.1} parent=1 // pred_region
      %30 = vsyncadd [#allocation6], 0
      %s31 = sshll.u32 %s1, 4
      %s32 = int_to_ptr.hbm [resolvable:$true] %s31
      %s33 = sshll.u32 [#allocation5], 4
      %s34 = int_to_ptr.vmem [resolvable:$true] %s33
      %39 = dma.hbm_to_vmem [thread:$0]  %s32, 256, %s34, [#allocation6], 64, 64, 4
    $region9: #{tpu_custom_call.1} parent=1 // pred_fallthru
      _
    // Predicated region
    $region10: #{tpu_custom_call.1} parent=1 // pred_check
      _
    $region11: #{tpu_custom_call.1} parent=1 // pred_check_branch
      %41 = sbr.rel (0) target = $region13
    $region12: #{tpu_custom_call.1} parent=1 // pred_region
      _
    $region13: #{tpu_custom_call.1} parent=1 // pred_fallthru
      _
    // Predicated region
    $region14: #{tpu_custom_call.1} parent=1 // pred_check
      _
    $region15: #{tpu_custom_call.1} parent=1 // pred_check_branch
      %43 = sbr.rel (0) target = $region17
    $region16: #{tpu_custom_call.1} parent=1 // pred_region
      %45 = vsyncadd [#allocation6], 0
      %s46 = sshll.u32 %s3, 4
      %s47 = int_to_ptr.hbm [resolvable:$true] %s46
      %s48 = sshll.u32 [#allocation7], 4
      %s49 = int_to_ptr.vmem [resolvable:$true] %s48
      %54 = dma.hbm_to_vmem [thread:$0]  %s47, 6144, %s49, [#allocation6], 64, 64, 4
    $region17: #{tpu_custom_call.1} parent=1 // pred_fallthru
      _
    // Predicated region
    $region18: #{tpu_custom_call.1} parent=1 // pred_check
      _
    $region19: #{tpu_custom_call.1} parent=1 // pred_check_branch
      %56 = sbr.rel (0) target = $region21
    $region20: #{tpu_custom_call.1} parent=1 // pred_region
      %58 = vsyncadd [#allocation9], 0
      %s59 = sshll.u32 %s4, 4
      %s60 = int_to_ptr.hbm [resolvable:$true] %s59
      %s61 = sshll.u32 [#allocation8], 4
      %s62 = int_to_ptr.vmem [resolvable:$true] %s61
      %67 = dma.hbm_to_vmem [thread:$0]  %s60, 256, %s62, [#allocation9], 128, 128, 8
    $region21: #{tpu_custom_call.1} parent=1 // pred_fallthru
      _
    // Predicated region
    $region22: #{tpu_custom_call.1} parent=1 // pred_check
      _
    $region23: #{tpu_custom_call.1} parent=1 // pred_check_branch
      %69 = sbr.rel (0) target = $region25
    $region24: #{tpu_custom_call.1} parent=1 // pred_region
      %71 = dma.done [#allocation3], 256
    $region25: #{tpu_custom_call.1} parent=1 // pred_fallthru
      _
    // Predicated region
    $region26: #{tpu_custom_call.1} parent=1 // pred_check
      _
    $region27: #{tpu_custom_call.1} parent=1 // pred_check_branch
      %73 = sbr.rel (0) target = $region29
    $region28: #{tpu_custom_call.1} parent=1 // pred_region
      %75 = dma.done [#allocation6], 256
    $region29: #{tpu_custom_call.1} parent=1 // pred_fallthru
      _
    // Predicated region
    $region30: #{tpu_custom_call.1} parent=1 // pred_check
      _
    $region31: #{tpu_custom_call.1} parent=1 // pred_check_branch
      %77 = sbr.rel (0) target = $region33
    $region32: #{tpu_custom_call.1} parent=1 // pred_region
      %79 = dma.done [#allocation6], 6144
    $region33: #{tpu_custom_call.1} parent=1 // pred_fallthru
      _
    // Predicated region
    $region34: #{tpu_custom_call.1} parent=1 // pred_check
      _
    $region35: #{tpu_custom_call.1} parent=1 // pred_check_branch
      %81 = sbr.rel (0) target = $region37
    $region36: #{tpu_custom_call.1} parent=1 // pred_region
      %83 = dma.done [#allocation9], 256
    $region37: #{tpu_custom_call.1} parent=1 // pred_fallthru
      _
    %v85 = vld [vmem:[#allocation5] sm:$0xf]
    %v86 = vld [vmem:[#allocation5 + $0x4] sm:$0xf]
    %v87 = vld [vmem:[#allocation5 + $0x8] sm:$0xf]
    %v88 = vld [vmem:[#allocation5 + $0xc] sm:$0xf]
    %v89 = vunpack.c.l.bf16 %v85
    %v90 = vunpack.c.l.bf16 %v86
    %v91 = vunpack.c.l.bf16 %v87
    %v92 = vunpack.c.l.bf16 %v88
    %vm93 = vcmask 261120
    %v94 = vsel %vm93, %v89, 0.0
    %95 = vadd.xlane.f32.xlu0 %v94
    %v96 = vpop.xlane.xlu0 %95
    %v97 = vsel %vm93, %v90, 0.0
    %98 = vadd.xlane.f32.xlu0 %v97
    %v99 = vpop.xlane.xlu0 %98
    %v100 = vsel %vm93, %v91, 0.0
    %101 = vadd.xlane.f32.xlu0 %v100
    %v102 = vpop.xlane.xlu0 %101
    %v103 = vsel %vm93, %v92, 0.0
    %104 = vadd.xlane.f32.xlu0 %v103
    %v105 = vpop.xlane.xlu0 %104
    %v106 = vld [vmem:[#allocation2] sm:$0xf]
    %v107 = vld [vmem:[#allocation2 + $0x4] sm:$0xf]
    %v108 = vld [vmem:[#allocation2 + $0x8] sm:$0xf]
    %v109 = vld [vmem:[#allocation2 + $0xc] sm:$0xf]
    %v114 = vunpack.c.l.b16 %v85
    %v115 = vunpack.c.l.b16 %v86
    %v116 = vunpack.c.l.b16 %v87
    %v117 = vunpack.c.l.b16 %v88
    %v118 = vpack.c.b16 %v115, %v114
    %v119 = vpack.c.b16 %v117, %v116
    %v124 = vunpack.c.l.b16 %v106
    %v125 = vunpack.c.l.b16 %v107
    %v126 = vunpack.c.l.b16 %v108
    %v127 = vunpack.c.l.b16 %v109
    %v128 = vpack.c.b16 %v125, %v124
    %v129 = vpack.c.b16 %v127, %v126
    %v133 = vsel %vm93, %v118, 0
    %v136 = vsel %vm93, %v119, 0
    %138 = vmatpush.bf16.msra.mxu0 0
    %139 = vmatpush.bf16.msra.mxu0 0
    %140 = vmatpush.bf16.msra.mxu0 0
    %141 = vmatpush.bf16.msra.mxu0 0
    %142 = vmatpush.bf16.msra.mxu0 0
    %143 = vmatpush.bf16.msra.mxu0 0
    %144 = vmatpush.bf16.msra.mxu0 %v129
    %145 = vmatpush.bf16.msra.mxu0 %v128
    %146 = vmatmul.bf16.gmra.mxu0 %v133
    %v147 = vpop.f32.mrf.mxu0
    %v148 = vadd.f32 0.0, %v147
    %v149 = vpop.f32.mrf.mxu0
    %v150 = vadd.f32 0.0, %v149
    %151 = vmatmul.bf16.gmra.mxu0 %v136
    %v152 = vpop.f32.mrf.mxu0
    %v153 = vadd.f32 0.0, %v152
    %v154 = vpop.f32.mrf.mxu0
    %v155 = vadd.f32 0.0, %v154
    %156 = vdwg.mxu0
    %v157 = vld [vmem:[#allocation7] sm:$0xf]
    %v158 = vld [vmem:[#allocation7 + $0x4] sm:$0xf]
    %v159 = vld [vmem:[#allocation7 + $0x8] sm:$0xf]
    %v160 = vld [vmem:[#allocation7 + $0xc] sm:$0xf]
    %v161 = vld [vmem:[#allocation7 + $0x10] sm:$0xf]
    %v162 = vld [vmem:[#allocation7 + $0x14] sm:$0xf]
    %v163 = vld [vmem:[#allocation7 + $0x18] sm:$0xf]
    %v164 = vld [vmem:[#allocation7 + $0x1c] sm:$0xf]
    %v165 = vld [vmem:[#allocation7 + $0x20] sm:$0xf]
    %v166 = vld [vmem:[#allocation7 + $0x24] sm:$0xf]
    %v167 = vld [vmem:[#allocation7 + $0x28] sm:$0xf]
    %v168 = vld [vmem:[#allocation7 + $0x2c] sm:$0xf]
    %v169 = vld [vmem:[#allocation7 + $0x30] sm:$0xf]
    %v170 = vld [vmem:[#allocation7 + $0x34] sm:$0xf]
    %v171 = vld [vmem:[#allocation7 + $0x38] sm:$0xf]
    %v172 = vld [vmem:[#allocation7 + $0x3c] sm:$0xf]
    %v173 = vpack.c.bf16 %v150, %v148
    %v174 = vpack.c.bf16 %v155, %v153
    %v175 = vld [vmem:[#allocation7 + $0x40] sm:$0xf]
    %v176 = vld [vmem:[#allocation7 + $0x44] sm:$0xf]
    %v177 = vld [vmem:[#allocation7 + $0x48] sm:$0xf]
    %v178 = vld [vmem:[#allocation7 + $0x4c] sm:$0xf]
    %v179 = vld [vmem:[#allocation7 + $0x50] sm:$0xf]
    %v180 = vld [vmem:[#allocation7 + $0x54] sm:$0xf]
    %v181 = vld [vmem:[#allocation7 + $0x58] sm:$0xf]
    %v182 = vld [vmem:[#allocation7 + $0x5c] sm:$0xf]
    %v183 = vld [vmem:[#allocation7 + $0x60] sm:$0xf]
    %v184 = vld [vmem:[#allocation7 + $0x64] sm:$0xf]
    %v185 = vld [vmem:[#allocation7 + $0x68] sm:$0xf]
    %v186 = vld [vmem:[#allocation7 + $0x6c] sm:$0xf]
    %v187 = vld [vmem:[#allocation7 + $0x70] sm:$0xf]
    %v188 = vld [vmem:[#allocation7 + $0x74] sm:$0xf]
    %v189 = vld [vmem:[#allocation7 + $0x78] sm:$0xf]
    %v190 = vld [vmem:[#allocation7 + $0x7c] sm:$0xf]
    %v207 = vunpack.c.l.b16 %v175
    %v208 = vunpack.c.l.b16 %v176
    %v209 = vunpack.c.l.b16 %v177
    %v210 = vunpack.c.l.b16 %v178
    %v211 = vunpack.c.l.b16 %v179
    %v212 = vunpack.c.l.b16 %v180
    %v213 = vunpack.c.l.b16 %v181
    %v214 = vunpack.c.l.b16 %v182
    %v215 = vunpack.c.l.b16 %v183
    %v216 = vunpack.c.l.b16 %v184
    %v217 = vunpack.c.l.b16 %v185
    %v218 = vunpack.c.l.b16 %v186
    %v219 = vunpack.c.l.b16 %v187
    %v220 = vunpack.c.l.b16 %v188
    %v221 = vunpack.c.l.b16 %v189
    %v222 = vunpack.c.l.b16 %v190
    %v223 = vpack.c.b16 %v208, %v207
    %v224 = vpack.c.b16 %v210, %v209
    %v225 = vpack.c.b16 %v212, %v211
    %v226 = vpack.c.b16 %v214, %v213
    %v227 = vpack.c.b16 %v216, %v215
    %v228 = vpack.c.b16 %v218, %v217
    %v229 = vpack.c.b16 %v220, %v219
    %v230 = vpack.c.b16 %v222, %v221
    %239 = vmatpush.bf16.msra.mxu0 %v230
    %240 = vmatpush.bf16.msra.mxu0 %v229
    %241 = vmatpush.bf16.msra.mxu0 %v228
    %242 = vmatpush.bf16.msra.mxu0 %v227
    %243 = vmatpush.bf16.msra.mxu0 %v226
    %244 = vmatpush.bf16.msra.mxu0 %v225
    %245 = vmatpush.bf16.msra.mxu0 %v224
    %246 = vmatpush.bf16.msra.mxu0 %v223
    %247 = vmatmul.bf16.gmra.mxu0 %v173
    %v248 = vpop.f32.mrf.mxu0
    %v249 = vadd.f32 0.0, %v248
    %v250 = vpop.f32.mrf.mxu0
    %v251 = vadd.f32 0.0, %v250
    %252 = vmatmul.bf16.gmra.mxu0 %v174
    %v253 = vpop.f32.mrf.mxu0
    %v254 = vadd.f32 0.0, %v253
    %v255 = vpop.f32.mrf.mxu0
    %v256 = vadd.f32 0.0, %v255
    %257 = vdwg.mxu0
    %v274 = vunpack.c.l.b16 %v157
    %v275 = vunpack.c.l.b16 %v158
    %v276 = vunpack.c.l.b16 %v159
    %v277 = vunpack.c.l.b16 %v160
    %v278 = vunpack.c.l.b16 %v161
    %v279 = vunpack.c.l.b16 %v162
    %v280 = vunpack.c.l.b16 %v163
    %v281 = vunpack.c.l.b16 %v164
    %v282 = vunpack.c.l.b16 %v165
    %v283 = vunpack.c.l.b16 %v166
    %v284 = vunpack.c.l.b16 %v167
    %v285 = vunpack.c.l.b16 %v168
    %v286 = vunpack.c.l.b16 %v169
    %v287 = vunpack.c.l.b16 %v170
    %v288 = vunpack.c.l.b16 %v171
    %v289 = vunpack.c.l.b16 %v172
    %v290 = vpack.c.b16 %v275, %v274
    %v291 = vpack.c.b16 %v277, %v276
    %v292 = vpack.c.b16 %v279, %v278
    %v293 = vpack.c.b16 %v281, %v280
    %v294 = vpack.c.b16 %v283, %v282
    %v295 = vpack.c.b16 %v285, %v284
    %v296 = vpack.c.b16 %v287, %v286
    %v297 = vpack.c.b16 %v289, %v288
    %306 = vmatpush.bf16.msra.mxu0 %v297
    %307 = vmatpush.bf16.msra.mxu0 %v296
    %308 = vmatpush.bf16.msra.mxu0 %v295
    %309 = vmatpush.bf16.msra.mxu0 %v294
    %310 = vmatpush.bf16.msra.mxu0 %v293
    %311 = vmatpush.bf16.msra.mxu0 %v292
    %312 = vmatpush.bf16.msra.mxu0 %v291
    %313 = vmatpush.bf16.msra.mxu0 %v290
    %314 = vmatmul.bf16.gmra.mxu0 %v128
    %v315 = vpop.f32.mrf.mxu0
    %v316 = vadd.f32 %v249, %v315
    %v317 = vpop.f32.mrf.mxu0
    %v318 = vadd.f32 %v251, %v317
    %319 = vmatmul.bf16.gmra.mxu0 %v129
    %v320 = vpop.f32.mrf.mxu0
    %v321 = vadd.f32 %v254, %v320
    %v322 = vpop.f32.mrf.mxu0
    %v323 = vadd.f32 %v256, %v322
    %324 = vdwg.mxu0
    %v325 = vld [vmem:[#allocation8] sm:$0x1]
    %v326 = vperm.slane %v325, 0
    %v327 = vadd.f32 %v316, %v326
    %v328 = vadd.f32 %v318, %v326
    %v329 = vadd.f32 %v321, %v326
    %v330 = vadd.f32 %v323, %v326
    %v331 = vld [vmem:[#allocation8 + $0x1] sm:$0x1]
    %v332 = vperm.slane %v331, 0
    %v333 = vmul.f32 %v96, %v332
    %v334 = vmul.f32 %v99, %v332
    %v335 = vmul.f32 %v102, %v332
    %v336 = vmul.f32 %v105, %v332
    %v337 = vadd.f32 %v327, %v333
    %v338 = vadd.f32 %v328, %v334
    %v339 = vadd.f32 %v329, %v335
    %v340 = vadd.f32 %v330, %v336
    %v341 = vadd.f32 %v337, %v338
    %v342 = vadd.f32 %v341, %v339
    %v343 = vadd.f32 %v342, %v340
    %v344 = vrot.slane %v343, 4
    %v345 = vadd.f32 %v343, %v344
    %v346 = vrot.slane %v345, 2
    %v347 = vadd.f32 %v345, %v346
    %v348 = vrot.slane %v347, 1
    %v349 = vadd.f32 %v347, %v348
    %v350 = vmul.f32 %v349, 0.03125
    %v351 = vmul.f32 %v337, %v337
    %v352 = vmul.f32 %v338, %v338
    %v353 = vmul.f32 %v339, %v339
    %v354 = vmul.f32 %v340, %v340
    %v355 = vadd.f32 %v351, %v352
    %v356 = vadd.f32 %v355, %v353
    %v357 = vadd.f32 %v356, %v354
    %v358 = vrot.slane %v357, 4
    %v359 = vadd.f32 %v357, %v358
    %v360 = vrot.slane %v359, 2
    %v361 = vadd.f32 %v359, %v360
    %v362 = vrot.slane %v361, 1
    %v363 = vadd.f32 %v361, %v362
    %v364 = vmul.f32 %v363, 0.03125
    %v365 = vmul.f32 %v350, %v350
    %v366 = vsub.f32 %v364, %v365
    %v367 = vld [vmem:[#allocation8 + $0x2] sm:$0x1]
    %v368 = vadd.f32 %v366, 1e-05
    %v369 = vrsqrt.pop %v368
    %v370 = vmul.f32 %v369, %v368
    %v371 = vmul.f32 %v370, %v369
    %v372 = vmul.f32 0.5, %v371
    %v373 = vsub.f32 1.5, %v372
    %v374 = vmul.f32 %v369, %v373
    %vm375 = vweird.f32 %v368
    %vm376 = vweird.f32 %v369
    %vm377 = vmor %vm375, %vm376
    %v378 = vsel %vm377, %v369, %v374
    %v379 = vmul.f32 %v367, %v378
    %v380 = vld [vmem:[#allocation8 + $0x3] sm:$0x1]
    %v381 = vmul.f32 %v379, %v350
    %v382 = vsub.f32 %v380, %v381
    %v383 = vperm.slane %v379, 0
    %v384 = vmul.f32 %v383, %v337
    %v385 = vmul.f32 %v383, %v338
    %v386 = vmul.f32 %v383, %v339
    %v387 = vmul.f32 %v383, %v340
    %v388 = vperm.slane %v382, 0
    %v389 = vadd.f32 %v384, %v388
    %v390 = vadd.f32 %v385, %v388
    %v391 = vadd.f32 %v386, %v388
    %v392 = vadd.f32 %v387, %v388
    %v393 = vmax.f32 %v389, 0.0
    %v394 = vmax.f32 %v390, 0.0
    %v395 = vmax.f32 %v391, 0.0
    %v396 = vmax.f32 %v392, 0.0
    %v397 = vpack.c.bf16 %v394, %v393
    %v398 = vpack.c.bf16 %v396, %v395
    %399 = vmatpush.bf16.msra.mxu0 0
    %400 = vmatpush.bf16.msra.mxu0 0
    %401 = vmatpush.bf16.msra.mxu0 0
    %402 = vmatpush.bf16.msra.mxu0 0
    %403 = vmatpush.bf16.msra.mxu0 0
    %404 = vmatpush.bf16.msra.mxu0 0
    %405 = vmatpush.bf16.msra.mxu0 %v398
    %406 = vmatpush.bf16.msra.mxu0 %v397
    %407 = vmatmul.bf16.gmra.mxu0 %v133
    %v408 = vpop.f32.mrf.mxu0
    %v409 = vadd.f32 0.0, %v408
    %v410 = vpop.f32.mrf.mxu0
    %v411 = vadd.f32 0.0, %v410
    %412 = vmatmul.bf16.gmra.mxu0 %v136
    %v413 = vpop.f32.mrf.mxu0
    %v414 = vadd.f32 0.0, %v413
    %v415 = vpop.f32.mrf.mxu0
    %v416 = vadd.f32 0.0, %v415
    %417 = vdwg.mxu0
    %v418 = vld [vmem:[#allocation7 + $0x80] sm:$0xf]
    %v419 = vld [vmem:[#allocation7 + $0x84] sm:$0xf]
    %v420 = vld [vmem:[#allocation7 + $0x88] sm:$0xf]
    %v421 = vld [vmem:[#allocation7 + $0x8c] sm:$0xf]
    %v422 = vld [vmem:[#allocation7 + $0x90] sm:$0xf]
    %v423 = vld [vmem:[#allocation7 + $0x94] sm:$0xf]
    %v424 = vld [vmem:[#allocation7 + $0x98] sm:$0xf]
    %v425 = vld [vmem:[#allocation7 + $0x9c] sm:$0xf]
    %v426 = vld [vmem:[#allocation7 + $0xa0] sm:$0xf]
    %v427 = vld [vmem:[#allocation7 + $0xa4] sm:$0xf]
    %v428 = vld [vmem:[#allocation7 + $0xa8] sm:$0xf]
    %v429 = vld [vmem:[#allocation7 + $0xac] sm:$0xf]
    %v430 = vld [vmem:[#allocation7 + $0xb0] sm:$0xf]
    %v431 = vld [vmem:[#allocation7 + $0xb4] sm:$0xf]
    %v432 = vld [vmem:[#allocation7 + $0xb8] sm:$0xf]
    %v433 = vld [vmem:[#allocation7 + $0xbc] sm:$0xf]
    %v434 = vpack.c.bf16 %v411, %v409
    %v435 = vpack.c.bf16 %v416, %v414
    %v436 = vld [vmem:[#allocation7 + $0xc0] sm:$0xf]
    %v437 = vld [vmem:[#allocation7 + $0xc4] sm:$0xf]
    %v438 = vld [vmem:[#allocation7 + $0xc8] sm:$0xf]
    %v439 = vld [vmem:[#allocation7 + $0xcc] sm:$0xf]
    %v440 = vld [vmem:[#allocation7 + $0xd0] sm:$0xf]
    %v441 = vld [vmem:[#allocation7 + $0xd4] sm:$0xf]
    %v442 = vld [vmem:[#allocation7 + $0xd8] sm:$0xf]
    %v443 = vld [vmem:[#allocation7 + $0xdc] sm:$0xf]
    %v444 = vld [vmem:[#allocation7 + $0xe0] sm:$0xf]
    %v445 = vld [vmem:[#allocation7 + $0xe4] sm:$0xf]
    %v446 = vld [vmem:[#allocation7 + $0xe8] sm:$0xf]
    %v447 = vld [vmem:[#allocation7 + $0xec] sm:$0xf]
    %v448 = vld [vmem:[#allocation7 + $0xf0] sm:$0xf]
    %v449 = vld [vmem:[#allocation7 + $0xf4] sm:$0xf]
    %v450 = vld [vmem:[#allocation7 + $0xf8] sm:$0xf]
    %v451 = vld [vmem:[#allocation7 + $0xfc] sm:$0xf]
    %v468 = vunpack.c.l.b16 %v436
    %v469 = vunpack.c.l.b16 %v437
    %v470 = vunpack.c.l.b16 %v438
    %v471 = vunpack.c.l.b16 %v439
    %v472 = vunpack.c.l.b16 %v440
    %v473 = vunpack.c.l.b16 %v441
    %v474 = vunpack.c.l.b16 %v442
    %v475 = vunpack.c.l.b16 %v443
    %v476 = vunpack.c.l.b16 %v444
    %v477 = vunpack.c.l.b16 %v445
    %v478 = vunpack.c.l.b16 %v446
    %v479 = vunpack.c.l.b16 %v447
    %v480 = vunpack.c.l.b16 %v448
    %v481 = vunpack.c.l.b16 %v449
    %v482 = vunpack.c.l.b16 %v450
    %v483 = vunpack.c.l.b16 %v451
    %v484 = vpack.c.b16 %v469, %v468
    %v485 = vpack.c.b16 %v471, %v470
    %v486 = vpack.c.b16 %v473, %v472
    %v487 = vpack.c.b16 %v475, %v474
    %v488 = vpack.c.b16 %v477, %v476
    %v489 = vpack.c.b16 %v479, %v478
    %v490 = vpack.c.b16 %v481, %v480
    %v491 = vpack.c.b16 %v483, %v482
    %500 = vmatpush.bf16.msra.mxu0 %v491
    %501 = vmatpush.bf16.msra.mxu0 %v490
    %502 = vmatpush.bf16.msra.mxu0 %v489
    %503 = vmatpush.bf16.msra.mxu0 %v488
    %504 = vmatpush.bf16.msra.mxu0 %v487
    %505 = vmatpush.bf16.msra.mxu0 %v486
    %506 = vmatpush.bf16.msra.mxu0 %v485
    %507 = vmatpush.bf16.msra.mxu0 %v484
    %508 = vmatmul.bf16.gmra.mxu0 %v434
    %v509 = vpop.f32.mrf.mxu0
    %v510 = vadd.f32 0.0, %v509
    %v511 = vpop.f32.mrf.mxu0
    %v512 = vadd.f32 0.0, %v511
    %513 = vmatmul.bf16.gmra.mxu0 %v435
    %v514 = vpop.f32.mrf.mxu0
    %v515 = vadd.f32 0.0, %v514
    %v516 = vpop.f32.mrf.mxu0
    %v517 = vadd.f32 0.0, %v516
    %518 = vdwg.mxu0
    %v535 = vunpack.c.l.b16 %v418
    %v536 = vunpack.c.l.b16 %v419
    %v537 = vunpack.c.l.b16 %v420
    %v538 = vunpack.c.l.b16 %v421
    %v539 = vunpack.c.l.b16 %v422
    %v540 = vunpack.c.l.b16 %v423
    %v541 = vunpack.c.l.b16 %v424
    %v542 = vunpack.c.l.b16 %v425
    %v543 = vunpack.c.l.b16 %v426
    %v544 = vunpack.c.l.b16 %v427
    %v545 = vunpack.c.l.b16 %v428
    %v546 = vunpack.c.l.b16 %v429
    %v547 = vunpack.c.l.b16 %v430
    %v548 = vunpack.c.l.b16 %v431
    %v549 = vunpack.c.l.b16 %v432
    %v550 = vunpack.c.l.b16 %v433
    %v551 = vpack.c.b16 %v536, %v535
    %v552 = vpack.c.b16 %v538, %v537
    %v553 = vpack.c.b16 %v540, %v539
    %v554 = vpack.c.b16 %v542, %v541
    %v555 = vpack.c.b16 %v544, %v543
    %v556 = vpack.c.b16 %v546, %v545
    %v557 = vpack.c.b16 %v548, %v547
    %v558 = vpack.c.b16 %v550, %v549
    %567 = vmatpush.bf16.msra.mxu0 %v558
    %568 = vmatpush.bf16.msra.mxu0 %v557
    %569 = vmatpush.bf16.msra.mxu0 %v556
    %570 = vmatpush.bf16.msra.mxu0 %v555
    %571 = vmatpush.bf16.msra.mxu0 %v554
    %572 = vmatpush.bf16.msra.mxu0 %v553
    %573 = vmatpush.bf16.msra.mxu0 %v552
    %574 = vmatpush.bf16.msra.mxu0 %v551
    %575 = vmatmul.bf16.gmra.mxu0 %v397
    %v576 = vpop.f32.mrf.mxu0
    %v577 = vadd.f32 %v510, %v576
    %v578 = vpop.f32.mrf.mxu0
    %v579 = vadd.f32 %v512, %v578
    %580 = vmatmul.bf16.gmra.mxu0 %v398
    %v581 = vpop.f32.mrf.mxu0
    %v582 = vadd.f32 %v515, %v581
    %v583 = vpop.f32.mrf.mxu0
    %v584 = vadd.f32 %v517, %v583
    %585 = vdwg.mxu0
    %v586 = vld [vmem:[#allocation8 + $0x4] sm:$0x1]
    %v587 = vperm.slane %v586, 0
    %v588 = vadd.f32 %v577, %v587
    %v589 = vadd.f32 %v579, %v587
    %v590 = vadd.f32 %v582, %v587
    %v591 = vadd.f32 %v584, %v587
    %v592 = vld [vmem:[#allocation8 + $0x5] sm:$0x1]
    %v593 = vperm.slane %v592, 0
    %v594 = vmul.f32 %v96, %v593
    %v595 = vmul.f32 %v99, %v593
    %v596 = vmul.f32 %v102, %v593
    %v597 = vmul.f32 %v105, %v593
    %v598 = vadd.f32 %v588, %v594
    %v599 = vadd.f32 %v589, %v595
    %v600 = vadd.f32 %v590, %v596
    %v601 = vadd.f32 %v591, %v597
    %v602 = vadd.f32 %v598, %v599
    %v603 = vadd.f32 %v602, %v600
    %v604 = vadd.f32 %v603, %v601
    %v605 = vrot.slane %v604, 4
    %v606 = vadd.f32 %v604, %v605
    %v607 = vrot.slane %v606, 2
    %v608 = vadd.f32 %v606, %v607
    %v609 = vrot.slane %v608, 1
    %v610 = vadd.f32 %v608, %v609
    %v611 = vmul.f32 %v610, 0.03125
    %v612 = vmul.f32 %v598, %v598
    %v613 = vmul.f32 %v599, %v599
    %v614 = vmul.f32 %v600, %v600
    %v615 = vmul.f32 %v601, %v601
    %v616 = vadd.f32 %v612, %v613
    %v617 = vadd.f32 %v616, %v614
    %v618 = vadd.f32 %v617, %v615
    %v619 = vrot.slane %v618, 4
    %v620 = vadd.f32 %v618, %v619
    %v621 = vrot.slane %v620, 2
    %v622 = vadd.f32 %v620, %v621
    %v623 = vrot.slane %v622, 1
    %v624 = vadd.f32 %v622, %v623
    %v625 = vmul.f32 %v624, 0.03125
    %v626 = vmul.f32 %v611, %v611
    %v627 = vsub.f32 %v625, %v626
    %v628 = vld [vmem:[#allocation8 + $0x6] sm:$0x1]
    %v629 = vadd.f32 %v627, 1e-05
    %v630 = vrsqrt.pop %v629
    %v631 = vmul.f32 %v630, %v629
    %v632 = vmul.f32 %v631, %v630
    %v633 = vmul.f32 0.5, %v632
    %v634 = vsub.f32 1.5, %v633
    %v635 = vmul.f32 %v630, %v634
    %vm636 = vweird.f32 %v629
    %vm637 = vweird.f32 %v630
    %vm638 = vmor %vm636, %vm637
    %v639 = vsel %vm638, %v630, %v635
    %v640 = vmul.f32 %v628, %v639
    %v641 = vld [vmem:[#allocation8 + $0x7] sm:$0x1]
    %v642 = vmul.f32 %v640, %v611
    %v643 = vsub.f32 %v641, %v642
    %v644 = vperm.slane %v640, 0
    %v645 = vmul.f32 %v644, %v598
    %v646 = vmul.f32 %v644, %v599
    %v647 = vmul.f32 %v644, %v600
    %v648 = vmul.f32 %v644, %v601
    %v649 = vperm.slane %v643, 0
    %v650 = vadd.f32 %v645, %v649
    %v651 = vadd.f32 %v646, %v649
    %v652 = vadd.f32 %v647, %v649
    %v653 = vadd.f32 %v648, %v649
    %v654 = vmax.f32 %v650, 0.0
    %v655 = vmax.f32 %v651, 0.0
    %v656 = vmax.f32 %v652, 0.0
    %v657 = vmax.f32 %v653, 0.0
    %v658 = vpack.c.bf16 %v655, %v654
    %v659 = vpack.c.bf16 %v657, %v656
    %v660 = vld [vmem:[%s2] sm:$0x1]
    %v662 = vsel %vm93, %v660, 0
    %664 = vmatpush.bf16.msra.mxu0 0
    %665 = vmatpush.bf16.msra.mxu0 0
    %666 = vmatpush.bf16.msra.mxu0 0
    %667 = vmatpush.bf16.msra.mxu0 0
    %668 = vmatpush.bf16.msra.mxu0 0
    %669 = vmatpush.bf16.msra.mxu0 0
    %670 = vmatpush.bf16.msra.mxu0 %v659
    %671 = vmatpush.bf16.msra.mxu0 %v658
    %672 = vmatmul.bf16.gmra.mxu0 %v662
    %v673 = vpop.f32.mrf.mxu0
    %v674 = vadd.f32 0.0, %v673
    %v675 = vpop.f32.mrf.mxu0
    %676 = vdwg.mxu0
    %v677 = vpack.c.bf16 %v674, %v674
    %v678 = vld [vmem:[#allocation7 + $0x100] sm:$0xf]
    %v679 = vld [vmem:[#allocation7 + $0x104] sm:$0xf]
    %v680 = vld [vmem:[#allocation7 + $0x108] sm:$0xf]
    %v681 = vld [vmem:[#allocation7 + $0x10c] sm:$0xf]
    %v682 = vld [vmem:[#allocation7 + $0x110] sm:$0xf]
    %v683 = vld [vmem:[#allocation7 + $0x114] sm:$0xf]
    %v684 = vld [vmem:[#allocation7 + $0x118] sm:$0xf]
    %v685 = vld [vmem:[#allocation7 + $0x11c] sm:$0xf]
    %v686 = vld [vmem:[#allocation7 + $0x120] sm:$0xf]
    %v687 = vld [vmem:[#allocation7 + $0x124] sm:$0xf]
    %v688 = vld [vmem:[#allocation7 + $0x128] sm:$0xf]
    %v689 = vld [vmem:[#allocation7 + $0x12c] sm:$0xf]
    %v690 = vld [vmem:[#allocation7 + $0x130] sm:$0xf]
    %v691 = vld [vmem:[#allocation7 + $0x134] sm:$0xf]
    %v692 = vld [vmem:[#allocation7 + $0x138] sm:$0xf]
    %v693 = vld [vmem:[#allocation7 + $0x13c] sm:$0xf]
    %v694 = vld [vmem:[#allocation8 + $0x8] sm:$0x1]
    %v695 = vperm.slane %v694, 0
    %v712 = vunpack.c.l.b16 %v678
    %v713 = vunpack.c.l.b16 %v679
    %v714 = vunpack.c.l.b16 %v680
    %v715 = vunpack.c.l.b16 %v681
    %v716 = vunpack.c.l.b16 %v682
    %v717 = vunpack.c.l.b16 %v683
    %v718 = vunpack.c.l.b16 %v684
    %v719 = vunpack.c.l.b16 %v685
    %v720 = vunpack.c.l.b16 %v686
    %v721 = vunpack.c.l.b16 %v687
    %v722 = vunpack.c.l.b16 %v688
    %v723 = vunpack.c.l.b16 %v689
    %v724 = vunpack.c.l.b16 %v690
    %v725 = vunpack.c.l.b16 %v691
    %v726 = vunpack.c.l.b16 %v692
    %v727 = vunpack.c.l.b16 %v693
    %v728 = vpack.c.b16 %v713, %v712
    %v729 = vpack.c.b16 %v715, %v714
    %v730 = vpack.c.b16 %v717, %v716
    %v731 = vpack.c.b16 %v719, %v718
    %v732 = vpack.c.b16 %v721, %v720
    %v733 = vpack.c.b16 %v723, %v722
    %v734 = vpack.c.b16 %v725, %v724
    %v735 = vpack.c.b16 %v727, %v726
    %744 = vmatpush.bf16.msra.mxu0 %v735
    %745 = vmatpush.bf16.msra.mxu0 %v734
    %746 = vmatpush.bf16.msra.mxu0 %v733
    %747 = vmatpush.bf16.msra.mxu0 %v732
    %748 = vmatpush.bf16.msra.mxu0 %v731
    %749 = vmatpush.bf16.msra.mxu0 %v730
    %750 = vmatpush.bf16.msra.mxu0 %v729
    %751 = vmatpush.bf16.msra.mxu0 %v728
    %752 = vmatmul.bf16.gmra.mxu0 %v677
    %v753 = vpop.f32.mrf.mxu0
    %v754 = vadd.f32 %v695, %v753
    %v755 = vpop.f32.mrf.mxu0
    %756 = vdwg.mxu0
    %v757 = vmax.f32 %v754, 0.0
    %v758 = vpack.c.bf16 %v757, %v757
    %v759 = vld [vmem:[#allocation7 + $0x140] sm:$0xf]
    %v760 = vld [vmem:[#allocation7 + $0x144] sm:$0xf]
    %v761 = vld [vmem:[#allocation7 + $0x148] sm:$0xf]
    %v762 = vld [vmem:[#allocation7 + $0x14c] sm:$0xf]
    %v763 = vld [vmem:[#allocation7 + $0x150] sm:$0xf]
    %v764 = vld [vmem:[#allocation7 + $0x154] sm:$0xf]
    %v765 = vld [vmem:[#allocation7 + $0x158] sm:$0xf]
    %v766 = vld [vmem:[#allocation7 + $0x15c] sm:$0xf]
    %v767 = vld [vmem:[#allocation7 + $0x160] sm:$0xf]
    %v768 = vld [vmem:[#allocation7 + $0x164] sm:$0xf]
    %v769 = vld [vmem:[#allocation7 + $0x168] sm:$0xf]
    %v770 = vld [vmem:[#allocation7 + $0x16c] sm:$0xf]
    %v771 = vld [vmem:[#allocation7 + $0x170] sm:$0xf]
    %v772 = vld [vmem:[#allocation7 + $0x174] sm:$0xf]
    %v773 = vld [vmem:[#allocation7 + $0x178] sm:$0xf]
    %v774 = vld [vmem:[#allocation7 + $0x17c] sm:$0xf]
    %v775 = vld [vmem:[#allocation8 + $0x9] sm:$0x1]
    %v776 = vperm.slane %v775, 0
    %v793 = vunpack.c.l.b16 %v759
    %v794 = vunpack.c.l.b16 %v760
    %v795 = vunpack.c.l.b16 %v761
    %v796 = vunpack.c.l.b16 %v762
    %v797 = vunpack.c.l.b16 %v763
    %v798 = vunpack.c.l.b16 %v764
    %v799 = vunpack.c.l.b16 %v765
    %v800 = vunpack.c.l.b16 %v766
    %v801 = vunpack.c.l.b16 %v767
    %v802 = vunpack.c.l.b16 %v768
    %v803 = vunpack.c.l.b16 %v769
    %v804 = vunpack.c.l.b16 %v770
    %v805 = vunpack.c.l.b16 %v771
    %v806 = vunpack.c.l.b16 %v772
    %v807 = vunpack.c.l.b16 %v773
    %v808 = vunpack.c.l.b16 %v774
    %v809 = vpack.c.b16 %v794, %v793
    %v810 = vpack.c.b16 %v796, %v795
    %v811 = vpack.c.b16 %v798, %v797
    %v812 = vpack.c.b16 %v800, %v799
    %v813 = vpack.c.b16 %v802, %v801
    %v814 = vpack.c.b16 %v804, %v803
    %v815 = vpack.c.b16 %v806, %v805
    %v816 = vpack.c.b16 %v808, %v807
    %825 = vmatpush.bf16.msra.mxu0 %v816
    %826 = vmatpush.bf16.msra.mxu0 %v815
    %827 = vmatpush.bf16.msra.mxu0 %v814
    %828 = vmatpush.bf16.msra.mxu0 %v813
    %829 = vmatpush.bf16.msra.mxu0 %v812
    %830 = vmatpush.bf16.msra.mxu0 %v811
    %831 = vmatpush.bf16.msra.mxu0 %v810
    %832 = vmatpush.bf16.msra.mxu0 %v809
    %833 = vmatmul.bf16.gmra.mxu0 %v758
    %v834 = vpop.f32.mrf.mxu0
    %v835 = vadd.f32 %v776, %v834
    %v836 = vpop.f32.mrf.mxu0
    %837 = vdwg.mxu0
    %838 = vst [vmem:[#allocation10] sm:$0x3] %v835
    // Predicated region
    $region38: #{tpu_custom_call.1} parent=1 // pred_check
      _
    $region39: #{tpu_custom_call.1} parent=1 // pred_check_branch
      %840 = sbr.rel (0) target = $region41
    $region40: #{tpu_custom_call.1} parent=1 // pred_region
      %842 = vsyncadd [#allocation4], 0
      %s844 = sshll.u32 [#allocation10], 4
      %s845 = int_to_ptr.vmem [resolvable:$true] %s844
      %s846 = sshll.u32 %s5, 4
      %s847 = int_to_ptr.hbm [resolvable:$true] %s846
      %849 = dma.vmem_to_hbm [thread:$0]  %s845, 32, %s847, [#allocation4]
    $region41: #{tpu_custom_call.1} parent=1 // pred_fallthru
      _
    // Predicated region
    $region42: #{tpu_custom_call.1} parent=1 // pred_check
      _
    $region43: #{tpu_custom_call.1} parent=1 // pred_check_branch
      %851 = sbr.rel (0) target = $region45
    $region44: #{tpu_custom_call.1} parent=1 // pred_region
      %853 = dma.done [#allocation4], 32
    $region45: #{tpu_custom_call.1} parent=1 // pred_fallthru
      _
    %854 = vsyncpa [#allocation3], 1
    %855 = vsyncpa [#allocation6], 1
    %856 = vsyncpa [#allocation9], 1
    %857 = vsyncpa [#allocation4], 1

</llo_original>
